<compile_context>
chip_gen: v5e
topology: v5e:2x2
jax: 0.10.0
libtpu: 0.0.40
codegen_flags: <defaults>
</compile_context>

<pallas_src>
import jax
import jax.numpy as jnp
from jax.experimental import pallas as pl
from jax.experimental.pallas import tpu as pltpu


_F = 8             # padded feature width (>= max(8, 6, 4, 1))
_W_ROWS = 24       # packed weight slab rows (3 layers x 8, multiple of 8)


def _round_up(x, m):
    return (x + m - 1) // m * m


def _cdiv(a, b):
    return (a + b - 1) // b


def _sigmoid(x):
    # Exact sigmoid via a single EUP tanh push (no approx reciprocal).
    return 0.5 * jnp.tanh(0.5 * x) + 0.5


def mlp_kernel(x_ref, w_ref, b_ref, o_ref):
    """One batch tile of the 3-layer sigmoid MLP, batch-on-lanes layout.

    x_ref: (8, TILE_N) bf16 input tile (features on sublanes, batch on lanes).
    w_ref: (24, 8) bf16 packed weight slab, VMEM-resident across the grid:
             rows 0-7   = W1 zero-padded to (8, 8)   (h1 = W1 @ x)
             rows 8-15  = W2 zero-padded to (8, 8)   (zero cols cancel the
                          sigmoid(0)=0.5 pad activations of h1)
             rows 16-23 = row 16 is w3 zero-padded to (1, 8), rest zero
    b_ref: (8, 8) f32 packed bias slab:
             col 0 = b1 (padded), col 1 = b2 (padded), [0, 2] = b3
    o_ref: (1, TILE_N) f32 lane-dense output row (batch on lanes).
    """
    x = x_ref[...]                                   # (8, TILE_N) bf16

    w1 = w_ref[0:8, :]                               # (8, 8) bf16
    w2 = w_ref[8:16, :]                              # (8, 8) bf16
    w3 = w_ref[16:17, :]                             # (1, 8) bf16
    b1 = b_ref[:, 0:1]                               # (8, 1) f32
    b2 = b_ref[:, 1:2]                               # (8, 1) f32
    b3 = b_ref[0:1, 2:3]                             # (1, 1) f32

    # bf16 x bf16 MXU dots with f32 accumulation; bias/sigmoid math in f32.
    z1 = jnp.dot(w1, x, preferred_element_type=jnp.float32) + b1
    h1 = _sigmoid(z1).astype(jnp.bfloat16)           # (8, TILE_N)

    z2 = jnp.dot(w2, h1, preferred_element_type=jnp.float32) + b2
    h2 = _sigmoid(z2).astype(jnp.bfloat16)           # (8, TILE_N)

    z3 = jnp.dot(w3, h2, preferred_element_type=jnp.float32) + b3
    o_ref[...] = _sigmoid(z3).astype(o_ref.dtype)    # (1, TILE_N)


def _pack_weights(w1, w2, w3):
    """Pack torch-layout weights into one (24, 8) bf16 slab (forward orient)."""
    wp = jnp.zeros((_W_ROWS, _F), jnp.float32)
    wp = wp.at[0:6, 0:8].set(w1.astype(jnp.float32))            # (6, 8)
    wp = wp.at[8:12, 0:6].set(w2.astype(jnp.float32))           # (4, 6)
    wp = wp.at[16:17, 0:4].set(w3.astype(jnp.float32).reshape(1, 4))
    return wp.astype(jnp.bfloat16)


def _pack_biases(b1, b2, b3):
    """Pack biases into one (8, 8) f32 slab (kept f32 for accuracy)."""
    bp = jnp.zeros((_F, _F), jnp.float32)
    bp = bp.at[0:6, 0].set(b1.astype(jnp.float32))
    bp = bp.at[0:4, 1].set(b2.astype(jnp.float32))
    bp = bp.at[0, 2].set(b3.astype(jnp.float32)[0])
    return bp


def mlp_forward(x, w1, b1, w2, b2, w3, b3, *, tile_n=16384):
    """x: (N, 8) f32. PyTorch layouts: w1 (6,8), b1 (6,), w2 (4,6), b2 (4,),
    w3 (1,4), b3 (1,). Returns (N, 1) f32, matching the sigmoid MLP forward."""
    n, d_in = x.shape
    assert d_in == 8

    # Batch tile: multiple of 128 (lane-dense), big enough to amortize grid
    # overhead, but capped so there are >= 2 tiles (v7x megacore sharding).
    tile_n = max(128, min(_round_up(tile_n, 128), _round_up(_cdiv(n, 2), 128)))
    n_pad = _round_up(n, tile_n)
    num_tiles = n_pad // tile_n

    # Fused transpose + bf16 cast + tail pad: (N, 8) f32 -> (8, n_pad) bf16.
    # TODO(synk): in a real pipeline the producer should emit bf16 (8, N)
    # directly so this cast/transpose/pad does not cost an extra HBM pass.
    xt = x.astype(jnp.bfloat16).T                               # (8, n)
    if n_pad != n:
        xt = jnp.pad(xt, ((0, 0), (0, n_pad - n)))

    w_slab = _pack_weights(w1, w2, w3)                          # (24, 8) bf16
    b_slab = _pack_biases(b1, b2, b3)                           # (8, 8) f32

    grid_spec = pltpu.PrefetchScalarGridSpec(
        num_scalar_prefetch=0,
        grid=(num_tiles,),
        in_specs=[
            # Batch-tiled lane-dense input: auto double-buffered over the grid.
            pl.BlockSpec((_F, tile_n), lambda i: (0, i)),
            # Resident packed weight / bias slabs (constant index maps).
            pl.BlockSpec((_W_ROWS, _F), lambda i: (0, 0)),
            pl.BlockSpec((_F, _F), lambda i: (0, 0)),
        ],
        out_specs=pl.BlockSpec((1, tile_n), lambda i: (0, i)),
    )

    out = pl.pallas_call(
        mlp_kernel,
        out_shape=jax.ShapeDtypeStruct((1, n_pad), jnp.float32),
        grid_spec=grid_spec,
        compiler_params=pltpu.CompilerParams(
            # Independent batch tiles -> shard across TensorCores on v7x.
            dimension_semantics=("parallel",),
        ),
    )(xt, w_slab, b_slab)

    # (1, n_pad) lane-major row -> (N, 1) column, dropping batch padding.
    return out[0, :n][:, None]


def _torch_style_linear_init(key, out_features, in_features):
    """Mimics torch.nn.Linear default init: U(-1/sqrt(fan_in), 1/sqrt(fan_in))."""
    kw, kb = jax.random.split(key)
    bound = 1.0 / jnp.sqrt(jnp.float32(in_features))
    w = jax.random.uniform(kw, (out_features, in_features), jnp.float32,
                           minval=-bound, maxval=bound)
    b = jax.random.uniform(kb, (out_features,), jnp.float32,
                           minval=-bound, maxval=bound)
    return w, b


if __name__ == "__main__":
    key = jax.random.PRNGKey(0)
    k_x, k1, k2, k3 = jax.random.split(key, 4)

    batch = 200  # deliberately not a multiple of 128: exercises padding + grid
    x = jax.random.normal(k_x, (batch, 8), jnp.float32)

    w1, b1 = _torch_style_linear_init(k1, 6, 8)
    w2, b2 = _torch_style_linear_init(k2, 4, 6)
    w3, b3 = _torch_style_linear_init(k3, 1, 4)

    out = mlp_forward(x, w1, b1, w2, b2, w3, b3)   # -> 2 grid tiles of 128
    out = jax.block_until_ready(out)

    # Pure f32 reference (torch semantics). The kernel quantizes the input,
    # weights and hidden activations to bf16, so allow a loose tolerance.
    ref = jax.nn.sigmoid(x @ w1.T + b1)
    ref = jax.nn.sigmoid(ref @ w2.T + b2)
    ref = jax.nn.sigmoid(ref @ w3.T + b3)

    assert out.shape == (batch, 1)
    max_err = float(jnp.max(jnp.abs(out - ref)))
    assert jnp.allclose(out, ref, atol=2e-2, rtol=2e-2), max_err

    print("KERNEL_OK")
</pallas_src>

<mosaic_0001>
module attributes {stable_mosaic.version = 11 : i64} {
  func.func @mlp_kernel(%arg0: i32, %arg1: memref<8x128xbf16, #tpu.memory_space<vmem>>, %arg2: memref<24x8xbf16, #tpu.memory_space<vmem>>, %arg3: memref<8x8xf32, #tpu.memory_space<vmem>>, %arg4: memref<1x128xf32, #tpu.memory_space<vmem>>) attributes {dimension_semantics = [#tpu.dimension_semantics<parallel>], iteration_bounds = array<i64: 2>, scalar_prefetch = 0 : i64, scratch_operands = 0 : i64, tpu.core_type = #tpu.core_type<tc>, window_params = [{transform_indices = @transform_0, window_bounds = array<i64: 8, 128>}, {pipeline_mode = #tpu.pipeline_mode<synchronous>, transform_indices = @transform_1, window_bounds = array<i64: 24, 8>}, {pipeline_mode = #tpu.pipeline_mode<synchronous>, transform_indices = @transform_2, window_bounds = array<i64: 8, 8>}, {transform_indices = @transform_3, window_bounds = array<i64: 1, 128>}]} {
    %c0 = arith.constant 0 : index
    %c0_0 = arith.constant 0 : index
    %0 = vector.load %arg1[%c0, %c0_0] : memref<8x128xbf16, #tpu.memory_space<vmem>>, vector<8x128xbf16>
    %c0_1 = arith.constant 0 : index
    %c0_2 = arith.constant 0 : index
    %1 = vector.load %arg2[%c0_1, %c0_2] : memref<24x8xbf16, #tpu.memory_space<vmem>>, vector<8x8xbf16>
    %c8 = arith.constant 8 : index
    %c0_3 = arith.constant 0 : index
    %2 = vector.load %arg2[%c8, %c0_3] : memref<24x8xbf16, #tpu.memory_space<vmem>>, vector<8x8xbf16>
    %c16 = arith.constant 16 : index
    %c0_4 = arith.constant 0 : index
    %3 = vector.load %arg2[%c16, %c0_4] : memref<24x8xbf16, #tpu.memory_space<vmem>>, vector<1x8xbf16>
    %c0_5 = arith.constant 0 : index
    %c0_6 = arith.constant 0 : index
    %4 = vector.load %arg3[%c0_5, %c0_6] : memref<8x8xf32, #tpu.memory_space<vmem>>, vector<8x1xf32>
    %c0_7 = arith.constant 0 : index
    %c1 = arith.constant 1 : index
    %5 = vector.load %arg3[%c0_7, %c1] : memref<8x8xf32, #tpu.memory_space<vmem>>, vector<8x1xf32>
    %c0_8 = arith.constant 0 : index
    %c2 = arith.constant 2 : index
    %6 = vector.load %arg3[%c0_8, %c2] : memref<8x8xf32, #tpu.memory_space<vmem>>, vector<1x1xf32>
    %cst = arith.constant dense<0.000000e+00> : vector<8x128xf32>
    %7 = tpu.matmul %1, %0, %cst {dimension_numbers = #tpu.dot_dimension_numbers<[1], [0], [0], [1], [0, 0, 1, 1], [], []>} : vector<8x8xbf16>, vector<8x128xbf16>, vector<8x128xf32> -> vector<8x128xf32>
    %8 = vector.broadcast %4 : vector<8x1xf32> to vector<8x128xf32>
    %9 = arith.addf %7, %8 : vector<8x128xf32>
    %cst_9 = arith.constant 5.000000e-01 : f32
    %10 = vector.broadcast %cst_9 : f32 to vector<8x128xf32>
    %11 = arith.mulf %10, %9 : vector<8x128xf32>
    %12 = math.tanh %11 : vector<8x128xf32>
    %cst_10 = arith.constant 5.000000e-01 : f32
    %13 = vector.broadcast %cst_10 : f32 to vector<8x128xf32>
    %14 = arith.mulf %13, %12 : vector<8x128xf32>
    %cst_11 = arith.constant 5.000000e-01 : f32
    %15 = vector.broadcast %cst_11 : f32 to vector<8x128xf32>
    %16 = arith.addf %14, %15 : vector<8x128xf32>
    %17 = arith.truncf %16 : vector<8x128xf32> to vector<8x128xbf16>
    %cst_12 = arith.constant dense<0.000000e+00> : vector<8x128xf32>
    %18 = tpu.matmul %2, %17, %cst_12 {dimension_numbers = #tpu.dot_dimension_numbers<[1], [0], [0], [1], [0, 0, 1, 1], [], []>} : vector<8x8xbf16>, vector<8x128xbf16>, vector<8x128xf32> -> vector<8x128xf32>
    %19 = vector.broadcast %5 : vector<8x1xf32> to vector<8x128xf32>
    %20 = arith.addf %18, %19 : vector<8x128xf32>
    %cst_13 = arith.constant 5.000000e-01 : f32
    %21 = vector.broadcast %cst_13 : f32 to vector<8x128xf32>
    %22 = arith.mulf %21, %20 : vector<8x128xf32>
    %23 = math.tanh %22 : vector<8x128xf32>
    %cst_14 = arith.constant 5.000000e-01 : f32
    %24 = vector.broadcast %cst_14 : f32 to vector<8x128xf32>
    %25 = arith.mulf %24, %23 : vector<8x128xf32>
    %cst_15 = arith.constant 5.000000e-01 : f32
    %26 = vector.broadcast %cst_15 : f32 to vector<8x128xf32>
    %27 = arith.addf %25, %26 : vector<8x128xf32>
    %28 = arith.truncf %27 : vector<8x128xf32> to vector<8x128xbf16>
    %cst_16 = arith.constant dense<0.000000e+00> : vector<1x128xf32>
    %29 = tpu.matmul %3, %28, %cst_16 {dimension_numbers = #tpu.dot_dimension_numbers<[1], [0], [0], [1], [0, 0, 1, 1], [], []>} : vector<1x8xbf16>, vector<8x128xbf16>, vector<1x128xf32> -> vector<1x128xf32>
    %30 = vector.broadcast %6 : vector<1x1xf32> to vector<1x128xf32>
    %31 = arith.addf %29, %30 : vector<1x128xf32>
    %cst_17 = arith.constant 5.000000e-01 : f32
    %32 = vector.broadcast %cst_17 : f32 to vector<1x128xf32>
    %33 = arith.mulf %32, %31 : vector<1x128xf32>
    %34 = math.tanh %33 : vector<1x128xf32>
    %cst_18 = arith.constant 5.000000e-01 : f32
    %35 = vector.broadcast %cst_18 : f32 to vector<1x128xf32>
    %36 = arith.mulf %35, %34 : vector<1x128xf32>
    %cst_19 = arith.constant 5.000000e-01 : f32
    %37 = vector.broadcast %cst_19 : f32 to vector<1x128xf32>
    %38 = arith.addf %36, %37 : vector<1x128xf32>
    %c0_20 = arith.constant 0 : index
    %c0_21 = arith.constant 0 : index
    %39 = vector.load %arg4[%c0_20, %c0_21] : memref<1x128xf32, #tpu.memory_space<vmem>>, vector<1x128xf32>
    tpu.vector_store %arg4[%c0_20, %c0_21], %38 {strides = array<i32>} : memref<1x128xf32, #tpu.memory_space<vmem>>, vector<1x128xf32>,
    return
  }
  func.func @transform_0(%arg0: i32) -> (i32, i32) {
    %c0_i32 = arith.constant 0 : i32
    %c0_i32_0 = arith.constant 0 : i32
    return %c0_i32, %arg0 : i32, i32
  }
  func.func @transform_1(%arg0: i32) -> (i32, i32) {
    %c0_i32 = arith.constant 0 : i32
    %c0_i32_0 = arith.constant 0 : i32
    %c0_i32_1 = arith.constant 0 : i32
    return %c0_i32, %c0_i32_0 : i32, i32
  }
  func.func @transform_2(%arg0: i32) -> (i32, i32) {
    %c0_i32 = arith.constant 0 : i32
    %c0_i32_0 = arith.constant 0 : i32
    %c0_i32_1 = arith.constant 0 : i32
    return %c0_i32, %c0_i32_0 : i32, i32
  }
  func.func @transform_3(%arg0: i32) -> (i32, i32) {
    %c0_i32 = arith.constant 0 : i32
    %c0_i32_0 = arith.constant 0 : i32
    return %c0_i32, %arg0 : i32, i32
  }
}

</mosaic_0001>

<llo_original>
// kernel: tpu_custom_call.1
$region0: #{tpu_custom_call.1}
  #allocation0 [shape = 'u32[]', space=smem, size = 0x4, offset = 0x4, fixed_abs, tag = 'smem constant byte address 0x4 - core index']
  #allocation1 [shape = 'u32[72,128]{1,0:T(1,128)}', space=vmem, size = 0x9000, scoped, tag = 'internal scratch']
  %s0 = inlined_call_operand.vmem [shape: bf16[8,256], index: 0, kind: input, shape index: {}]
  %s1 = inlined_call_operand.vmem [shape: bf16[24,8], index: 1, kind: input, shape index: {}]
  %s2 = inlined_call_operand.vmem [shape: f32[8,8], index: 2, kind: input, shape index: {}]
  %s3 = inlined_call_operand.hbm [shape: f32[1,256], index: 3, kind: output, shape index: {}]
  %s4 = sld [smem:[#allocation0]]
  $region45: #{tpu_custom_call.1} parent=0
    _
  %s6 = ssub.s32 1, %s4
  %s7 = scalar_select 0, %s6, %s4
  $region1: #{tpu_custom_call.1} parent=0
    #allocation2 [shape = 'u8[1024]{0}', space=vmem, size = 0x400, scoped, tag = 'output window, operand 0']
    #allocation3 [shape = 's32[2]{0}', space=sflag, size = 0x8, scoped, tag = 'scoped memory for tpu_custom_call.1']
    %8 = vsyncpa [#allocation3], 0
    %s9 = scalar_lea.sflag [#allocation3], 1
    %10 = vsyncpa %s9, 0
    loop: start=0, step=1, limit=4
    $region2: #{tpu_custom_call.1} parent=1 // loop_pre_header
      _
    $region3: #{tpu_custom_call.1} parent=1 // loop_header
      %s12 = sphi 0, %s16
      %p13 = scmp.ge.s32.totalorder %s12, 4
      %s22 = sphi 0, %s24
      %s25 = sphi 0, %s22
      %s26 = sphi 0, %s25
      %s42 = sphi 0, %s26
      %s46 = sphi 0, %s46
      %s48 = sphi 0, %s46
      %s49 = sphi 0, %s48
      %s63 = sphi 0, %s49
      %s67 = sphi 0, %s67
      %s69 = sphi 0, %s67
      %s70 = sphi 0, %s69
      %s84 = sphi 0, %s70
      %s90 = sphi 0, %s92
      %s93 = sphi 0, %s90
      %s94 = sphi 0, %s93
      %s110 = sphi 0, %s94
    $region4: #{tpu_custom_call.1} parent=1 // loop_header_branch
      %15 = sbr.rel (%p13) target = $region8
    $region5: #{tpu_custom_call.1} parent=1 // loop_body
      %s17 = ssub.s32 %s12, 1
      %s18 = ssub.s32 %s12, 2
      %s19 = sadd.s32 %s12, 1
      %s20 = ssub.s32 %s12, %s19
      %p21 = scmp.eq.s32.totalorder %s20, 0
      %s23 = sadd.s32 %s22, 1
      %s24 = scalar_select %p21, %s22, %s23
      %p27 = pneg %p21
      %p28 = scmp.eq.s32.totalorder %s12, 1
      %p29 = por %p27, %p28
      %p30 = scmp.ne.s32.totalorder %s22, %s25
      %p31 = scmp.eq.s32.totalorder %s12, 0
      %p32 = por %p30, %p31
      %p33 = scmp.ne.s32.totalorder %s22, %s25
      %p34 = scmp.eq.s32.totalorder %s17, 1
      %p35 = por %p33, %p34
      %p36 = scmp.ne.s32.totalorder %s25, %s26
      %p37 = scmp.eq.s32.totalorder %s17, 0
      %p38 = por %p36, %p37
      %p39 = scmp.ne.s32.totalorder %s25, %s26
      %p40 = scmp.eq.s32.totalorder %s18, 1
      %p41 = por %p39, %p40
      %p43 = scmp.ne.s32.totalorder %s26, %s42
      %p44 = scmp.eq.s32.totalorder %s18, 0
      %p45 = por %p43, %p44
      %s47 = sadd.s32 %s46, 1
      %p50 = scmp.eq.s32.totalorder %s12, 1
      %p51 = scmp.ne.s32.totalorder %s46, %s48
      %p52 = scmp.eq.s32.totalorder %s12, 0
      %p53 = por %p51, %p52
      %p54 = scmp.ne.s32.totalorder %s46, %s48
      %p55 = scmp.eq.s32.totalorder %s17, 1
      %p56 = por %p54, %p55
      %p57 = scmp.ne.s32.totalorder %s48, %s49
      %p58 = scmp.eq.s32.totalorder %s17, 0
      %p59 = por %p57, %p58
      %p60 = scmp.ne.s32.totalorder %s48, %s49
      %p61 = scmp.eq.s32.totalorder %s18, 1
      %p62 = por %p60, %p61
      %p64 = scmp.ne.s32.totalorder %s49, %s63
      %p65 = scmp.eq.s32.totalorder %s18, 0
      %p66 = por %p64, %p65
      %s68 = sadd.s32 %s67, 1
      %p71 = scmp.eq.s32.totalorder %s12, 1
      %p72 = scmp.ne.s32.totalorder %s67, %s69
      %p73 = scmp.eq.s32.totalorder %s12, 0
      %p74 = por %p72, %p73
      %p75 = scmp.ne.s32.totalorder %s67, %s69
      %p76 = scmp.eq.s32.totalorder %s17, 1
      %p77 = por %p75, %p76
      %p78 = scmp.ne.s32.totalorder %s69, %s70
      %p79 = scmp.eq.s32.totalorder %s17, 0
      %p80 = por %p78, %p79
      %p81 = scmp.ne.s32.totalorder %s69, %s70
      %p82 = scmp.eq.s32.totalorder %s18, 1
      %p83 = por %p81, %p82
      %p85 = scmp.ne.s32.totalorder %s70, %s84
      %p86 = scmp.eq.s32.totalorder %s18, 0
      %p87 = por %p85, %p86
      %s88 = ssub.s32 %s12, %s19
      %p89 = scmp.eq.s32.totalorder %s88, 0
      %s91 = sadd.s32 %s90, 1
      %s92 = scalar_select %p89, %s90, %s91
      %p95 = pneg %p89
      %p96 = scmp.eq.s32.totalorder %s12, 1
      %p97 = por %p95, %p96
      %p98 = scmp.ne.s32.totalorder %s90, %s93
      %p99 = scmp.eq.s32.totalorder %s12, 0
      %p100 = por %p98, %p99
      %p101 = scmp.ne.s32.totalorder %s90, %s93
      %p102 = scmp.eq.s32.totalorder %s17, 1
      %p103 = por %p101, %p102
      %p104 = scmp.ne.s32.totalorder %s93, %s94
      %p105 = scmp.eq.s32.totalorder %s17, 0
      %p106 = por %p104, %p105
      %p107 = scmp.ne.s32.totalorder %s93, %s94
      %p108 = scmp.eq.s32.totalorder %s18, 1
      %p109 = por %p107, %p108
      %p111 = scmp.ne.s32.totalorder %s94, %s110
      %p112 = scmp.eq.s32.totalorder %s18, 0
      %p113 = por %p111, %p112
      %p114 = scmp.le.s32.totalorder 1, %s12
      %p115 = scmp.lt.s32.totalorder %s12, 3
      %p116 = pnand %p114, %p115
      %p117 = pneg %p116
      // Predicated region
      $region9: #{tpu_custom_call.1} parent=5 // pred_check
        _
      $region10: #{tpu_custom_call.1} parent=5 // pred_check_branch
        %119 = sbr.rel (%p116) target = $region12
      $region11: #{tpu_custom_call.1} parent=5 // pred_region
        %s120 = ssub.s32 %s12, 1
        // Predicated region
        $region13: #{tpu_custom_call.1} parent=11 // pred_check
          %p121 = pneg %p59
        $region14: #{tpu_custom_call.1} parent=11 // pred_check_branch
          %123 = sbr.rel (%p121) target = $region16
        $region15: #{tpu_custom_call.1} parent=11 // pred_region
          _
        $region16: #{tpu_custom_call.1} parent=11 // pred_fallthru
          _
        // Predicated region
        $region17: #{tpu_custom_call.1} parent=11 // pred_check
          %p124 = pneg %p80
        $region18: #{tpu_custom_call.1} parent=11 // pred_check_branch
          %126 = sbr.rel (%p124) target = $region20
        $region19: #{tpu_custom_call.1} parent=11 // pred_region
          _
        $region20: #{tpu_custom_call.1} parent=11 // pred_fallthru
          _
      $region12: #{tpu_custom_call.1} parent=5 // pred_fallthru
        _
      %p127 = scmp.lt.s32.totalorder %s12, 2
      // Predicated region
      $region21: #{tpu_custom_call.1} parent=5 // pred_check
        %p128 = pneg %p127
      $region22: #{tpu_custom_call.1} parent=5 // pred_check_branch
        %130 = sbr.rel (%p128) target = $region24
      $region23: #{tpu_custom_call.1} parent=5 // pred_region
        // Predicated region
        $region25: #{tpu_custom_call.1} parent=23 // pred_check
          %p131 = pneg %p32
        $region26: #{tpu_custom_call.1} parent=23 // pred_check_branch
          %133 = sbr.rel (%p131) target = $region28
        $region27: #{tpu_custom_call.1} parent=23 // pred_region
          %p134 = scmp.lt.s32.totalorder %s12, 1
          %s135 = scalar_select %p134, %s12, 1
          %s136 = smul.addr %s135, 4
          %s137 = scalar_lea.vmem %s0, %s136
        $region28: #{tpu_custom_call.1} parent=23 // pred_fallthru
          _
      $region24: #{tpu_custom_call.1} parent=5 // pred_fallthru
        _
      %p138 = scmp.le.s32.totalorder 1, %s12
      %p139 = scmp.lt.s32.totalorder %s12, 3
      %p140 = pnand %p138, %p139
      %p141 = pneg %p140
      // Predicated region
      $region29: #{tpu_custom_call.1} parent=5 // pred_check
        _
      $region30: #{tpu_custom_call.1} parent=5 // pred_check_branch
        %143 = sbr.rel (%p140) target = $region32
      $region31: #{tpu_custom_call.1} parent=5 // pred_region
        %s144 = ssub.s32 %s12, 1
        %p145 = scmp.lt.s32.totalorder %s17, 1
        %s146 = scalar_select %p145, %s17, 1
        %s147 = smul.addr %s146, 4
        %s148 = scalar_lea.vmem %s0, %s147
        %p149 = pneg %p38
        %p150 = pneg %p35
        %p151 = pneg %p59
        %p152 = pneg %p56
        %p153 = pneg %p80
        %p154 = pneg %p77
        %p155 = pneg %p106
        %p156 = pneg %p103
        %s157 = sand.u32 %s93, 1
        %s158 = scalar_lea.sflag [#allocation3], %s157
        %s159 = sand.u32 %s93, 1
        %s160 = scalar_lea.vmem [#allocation2], %s159
        %p161 = scmp.lt.s32.totalorder %s17, 1
        %s162 = scalar_select %p161, %s17, 1
        %s163 = smul.addr %s162, 4
        %s164 = scalar_lea.vmem %s0, %s163
        %v166 = vld [vmem:[%s164] sm:$0xf]
        %v167 = vld [vmem:[%s1] sm:$0xf]
        %v168 = vld [vmem:[%s1 + $0x4] sm:$0xf]
        %v169 = vld [vmem:[%s1 + $0x8] sm:$0x1]
        %v170 = vld [vmem:[%s2] sm:$0xff]
        %v171 = vld [vmem:[%s2] sm:$0x1]
        %173 = vset.pattern.permute.xlu0 0
        %174 = vperm.xlu0 %173, %v170
        %v175 = vpop.permute.xlu0 %174
        %vm177 = vcmask 64512
        %v179 = vsel %vm177, %v167, 0
        %vm181 = vcmask 1043456
        %v183 = vsel %vm181, %v166, 0
        %185 = vmatpush.bf16.msra.mxu0 0
        %186 = vmatpush.bf16.msra.mxu0 0
        %187 = vmatpush.bf16.msra.mxu0 0
        %188 = vmatpush.bf16.msra.mxu0 0
        %189 = vmatpush.bf16.msra.mxu0 0
        %190 = vmatpush.bf16.msra.mxu0 0
        %191 = vmatpush.bf16.msra.mxu0 0
        %192 = vmatpush.bf16.msra.mxu0 %v183
        %193 = vmatmul.bf16.gmra.mxu0 %v179
        %v194 = vpop.f32.mrf.mxu0
        %v195 = vadd.f32 %v175, %v194
        %v196 = vpop.f32.mrf.mxu0
        %197 = vdwg.mxu0
        %v198 = vmul.f32 %v195, 0.5
        %v199 = vtanh.pop %v198
        %v200 = vmul.f32 %v199, 0.5
        %v201 = vadd.f32 %v200, 0.5
        %v202 = vpack.c.bf16 %v201, %v201
        %203 = vset.pattern.permute.xlu0 1
        %204 = vperm.xlu0 %203, %v170
        %v205 = vpop.permute.xlu0 %204
        %v208 = vsel %vm177, %v168, 0
        %v211 = vsel %vm181, %v202, 0
        %213 = vmatpush.bf16.msra.mxu0 0
        %214 = vmatpush.bf16.msra.mxu0 0
        %215 = vmatpush.bf16.msra.mxu0 0
        %216 = vmatpush.bf16.msra.mxu0 0
        %217 = vmatpush.bf16.msra.mxu0 0
        %218 = vmatpush.bf16.msra.mxu0 0
        %219 = vmatpush.bf16.msra.mxu0 0
        %220 = vmatpush.bf16.msra.mxu0 %v211
        %221 = vmatmul.bf16.gmra.mxu0 %v208
        %v222 = vpop.f32.mrf.mxu0
        %v223 = vadd.f32 %v205, %v222
        %v224 = vpop.f32.mrf.mxu0
        %225 = vdwg.mxu0
        %v226 = vmul.f32 %v223, 0.5
        %v227 = vtanh.pop %v226
        %v228 = vmul.f32 %v227, 0.5
        %v229 = vadd.f32 %v228, 0.5
        %v230 = vpack.c.bf16 %v229, %v229
        %232 = vset.pattern.permute.xlu0 2
        %233 = vperm.xlu0 %232, %v171
        %v234 = vpop.permute.xlu0 %233
        %v237 = vsel %vm177, %v169, 0
        %v240 = vsel %vm181, %v230, 0
        %242 = vmatpush.bf16.msra.mxu0 0
        %243 = vmatpush.bf16.msra.mxu0 0
        %244 = vmatpush.bf16.msra.mxu0 0
        %245 = vmatpush.bf16.msra.mxu0 0
        %246 = vmatpush.bf16.msra.mxu0 0
        %247 = vmatpush.bf16.msra.mxu0 0
        %248 = vmatpush.bf16.msra.mxu0 0
        %249 = vmatpush.bf16.msra.mxu0 %v240
        %250 = vmatmul.bf16.gmra.mxu0 %v237
        %v251 = vpop.f32.mrf.mxu0
        %v252 = vadd.f32 %v234, %v251
        %v253 = vpop.f32.mrf.mxu0
        %254 = vdwg.mxu0
        %v255 = vmul.f32 %v252, 0.5
        %v256 = vtanh.pop %v255
        %v257 = vmul.f32 %v256, 0.5
        %v258 = vadd.f32 %v257, 0.5
        %259 = vst [vmem:[%s160] sm:$0x1] %v258
        %s260 = sand.u32 %s93, 1
        %s261 = scalar_lea.sflag [#allocation3], %s260
        %s262 = sand.u32 %s93, 1
        %s263 = scalar_lea.vmem [#allocation2], %s262
        // Predicated region
        $region33: #{tpu_custom_call.1} parent=31 // pred_check
          %p264 = pneg %p103
        $region34: #{tpu_custom_call.1} parent=31 // pred_check_branch
          %266 = sbr.rel (%p264) target = $region36
        $region35: #{tpu_custom_call.1} parent=31 // pred_region
          %268 = vsyncadd %s261, 0
          %s269 = scalar_lea.hbm %s3, %s17
          %s271 = sshll.u32 %s263, 4
          %s272 = int_to_ptr.vmem [resolvable:$true] %s271
          %s273 = sshll.u32 %s269, 4
          %s274 = int_to_ptr.hbm [resolvable:$true] %s273
          %276 = dma.vmem_to_hbm [thread:$0]  %s272, 16, %s274, %s261
        $region36: #{tpu_custom_call.1} parent=31 // pred_fallthru
          _
      $region32: #{tpu_custom_call.1} parent=5 // pred_fallthru
        _
      %p277 = scmp.le.s32.totalorder 2, %s12
      // Predicated region
      $region37: #{tpu_custom_call.1} parent=5 // pred_check
        %p278 = pneg %p277
      $region38: #{tpu_custom_call.1} parent=5 // pred_check_branch
        %280 = sbr.rel (%p278) target = $region40
      $region39: #{tpu_custom_call.1} parent=5 // pred_region
        %s281 = ssub.s32 %s12, 2
        // Predicated region
        $region41: #{tpu_custom_call.1} parent=39 // pred_check
          %p282 = pneg %p109
        $region42: #{tpu_custom_call.1} parent=39 // pred_check_branch
          %284 = sbr.rel (%p282) target = $region44
        $region43: #{tpu_custom_call.1} parent=39 // pred_region
          %s285 = sand.u32 %s94, 1
          %s286 = scalar_lea.sflag [#allocation3], %s285
          %s287 = sand.u32 %s94, 1
          %s288 = scalar_lea.vmem [#allocation2], %s287
          %290 = dma.done %s286, 16
        $region44: #{tpu_custom_call.1} parent=39 // pred_fallthru
          _
      $region40: #{tpu_custom_call.1} parent=5 // pred_fallthru
        _
    $region6: #{tpu_custom_call.1} parent=1 // loop_footer
      %s16 = sadd.s32 1, %s12
    $region7: #{tpu_custom_call.1} parent=1 // loop_footer_branch
      %11 = sbr.rel target = $region3
    $region8: #{tpu_custom_call.1} parent=1 // loop_exit
      _
    %291 = vsyncpa [#allocation3], 1
    %s292 = scalar_lea.sflag [#allocation3], 1
    %293 = vsyncpa %s292, 1

</llo_original>
